<compile_context>
chip_gen: v7x
topology: tpu7x:2x2x1
jax: 0.10.0
libtpu: 0.0.40
codegen_flags: <defaults>
</compile_context>

<pallas_src>
import jax
import jax.numpy as jnp
from jax.experimental import pallas as pl
from jax.experimental.pallas import tpu as pltpu


# ----------------------------------------------------------------------------
# Kernels
# ----------------------------------------------------------------------------
def predict_kernel(x_ref, w1_ref, b1_ref, w2_ref, b2_ref, w3_ref, b3_ref, o_ref):
    """Eval-mode forward (dropout is identity)."""
    # Layer 1 (K=1): VPU outer product instead of a degenerate MXU matmul.
    h1 = jnp.maximum(x_ref[...] * w1_ref[...] + b1_ref[...], 0.0)          # (N, H)
    # Layer 2: the only MXU matmul; sigmoid runs on the EUP.
    h2 = jax.nn.sigmoid(
        jnp.dot(h1, w2_ref[...], preferred_element_type=jnp.float32) + b2_ref[...])
    # Layer 3 (N_out=1): elementwise multiply + lane reduce (XLU), off the MXU.
    o_ref[...] = jnp.sum(h2 * w3_ref[...], axis=-1, keepdims=True) + b3_ref[...]


def mc_kernel(x_ref, w1_ref, b1_ref, w2_ref, b2_ref, w3_ref, b3_ref,
              mask1_ref, mask2_ref,
              mean_ref, var_ref, result_ref):
    """All S Monte-Carlo samples in a single invocation (samples stacked into M)."""
    n = x_ref.shape[0]
    h = w1_ref.shape[1]
    s = mask1_ref.shape[0] // n

    # Layer 1 (K=1 -> outer product on the VPU). Identical for every sample, so compute
    # it once on (N, H) and replicate across samples (sublane stack, trivial reshape).
    h1 = jnp.maximum(x_ref[...] * w1_ref[...] + b1_ref[...], 0.0)          # (N, H)
    h1 = jnp.broadcast_to(h1[None], (s, n, h)).reshape(s * n, h)           # (S*N, H)
    h1 = h1 * mask1_ref[...]            # Dropout #1 (mask pre-scaled by 1/keep)

    # Layer 2: one (S*N, H) x (H, H) MXU matmul for all samples; sigmoid -> EUP.
    h2 = jax.nn.sigmoid(
        jnp.dot(h1, w2_ref[...], preferred_element_type=jnp.float32) + b2_ref[...])
    h2 = h2 * mask2_ref[...]            # Dropout #2

    # Layer 3 (N_out=1): elementwise multiply + lane reduce (XLU), off the MXU.
    out = jnp.sum(h2 * w3_ref[...], axis=-1, keepdims=True) + b3_ref[...]  # (S*N, 1)

    # result[s] = net(x): single slab store (reshape only splits the sublane dim).
    result_ref[...] = out.reshape(s, n, 1)

    # Sample statistics: small static unrolled loop; partial sums stay in vregs.
    acc = jnp.zeros((n, 1), jnp.float32)
    acc2 = jnp.zeros((n, 1), jnp.float32)
    for i in range(s):
        v = out[i * n:(i + 1) * n, :]
        acc = acc + v
        acc2 = acc2 + v * v
    inv_s = 1.0 / float(s)
    m = acc * inv_s
    mean_ref[...] = m
    var_ref[...] = acc2 * inv_s - m * m   # E[x^2] - E[x]^2 (biased, matches torch code)


# ----------------------------------------------------------------------------
# Wrappers
# ----------------------------------------------------------------------------
def _full2d(shape):
    return pl.BlockSpec(shape, lambda i: (0, 0))


def mc_dropout_predict(x, params):
    """predict() path (mc_flg=False): y = net(x), dropout inactive."""
    n = x.shape[0]
    h = params["w1"].shape[1]
    return pl.pallas_call(
        predict_kernel,
        out_shape=jax.ShapeDtypeStruct((n, 1), jnp.float32),
        grid=(1,),
        in_specs=[
            _full2d((n, 1)),        # x
            _full2d((1, h)),        # w1 (row)
            _full2d((1, h)),        # b1
            _full2d((h, h)),        # w2 (in, out)
            _full2d((1, h)),        # b2
            _full2d((1, h)),        # w3 (row)
            _full2d((1, 1)),        # b3
        ],
        out_specs=_full2d((n, 1)),
        compiler_params=pltpu.CompilerParams(dimension_semantics=("arbitrary",)),
    )(x, params["w1"], params["b1"], params["w2"], params["b2"],
      params["w3"], params["b3"])


def make_dropout_masks(key, n, hidden, sampling, drop_p):
    """Inverted-dropout masks, pre-scaled by 1/keep (one per dropout layer)."""
    keep = 1.0 - drop_p
    scale = 1.0 / keep
    k1, k2 = jax.random.split(key)
    m1 = jax.random.bernoulli(k1, keep, (sampling * n, hidden)).astype(jnp.float32) * scale
    m2 = jax.random.bernoulli(k2, keep, (sampling * n, hidden)).astype(jnp.float32) * scale
    return m1, m2


def mc_dropout_mc_forward(x, params, dropout_key, *, drop_p=0.1, sampling=8):
    """mc() path (mc_flg=True): returns (mean, var, result) like MCDropoutReg.forward."""
    n = x.shape[0]
    h = params["w1"].shape[1]
    mask1, mask2 = make_dropout_masks(dropout_key, n, h, sampling, drop_p)

    return pl.pallas_call(
        mc_kernel,
        out_shape=(jax.ShapeDtypeStruct((n, 1), jnp.float32),            # mean
                   jax.ShapeDtypeStruct((n, 1), jnp.float32),            # var
                   jax.ShapeDtypeStruct((sampling, n, 1), jnp.float32)), # result
        grid=(1,),
        in_specs=[
            _full2d((n, 1)),               # x
            _full2d((1, h)),               # w1
            _full2d((1, h)),               # b1
            _full2d((h, h)),               # w2
            _full2d((1, h)),               # b2
            _full2d((1, h)),               # w3
            _full2d((1, 1)),               # b3
            _full2d((sampling * n, h)),    # dropout mask 1
            _full2d((sampling * n, h)),    # dropout mask 2
        ],
        out_specs=[
            _full2d((n, 1)),
            _full2d((n, 1)),
            pl.BlockSpec((sampling, n, 1), lambda i: (0, 0, 0)),
        ],
        compiler_params=pltpu.CompilerParams(dimension_semantics=("arbitrary",)),
    )(x, params["w1"], params["b1"], params["w2"], params["b2"],
      params["w3"], params["b3"], mask1, mask2)


# ----------------------------------------------------------------------------
# Deterministic parameters (PyTorch nn.Linear-style uniform init) + references
# ----------------------------------------------------------------------------
def make_params(key, hidden):
    """Weights stored so each layer is y = x @ W + b; layer-3 weight kept as a (1,H) row."""
    ks = jax.random.split(key, 6)

    def u(k, shape, fan_in):
        bound = 1.0 / (fan_in ** 0.5)
        return jax.random.uniform(k, shape, jnp.float32, -bound, bound)

    return dict(
        w1=u(ks[0], (1, hidden), 1),            b1=u(ks[1], (1, hidden), 1),
        w2=u(ks[2], (hidden, hidden), hidden),  b2=u(ks[3], (1, hidden), hidden),
        w3=u(ks[4], (1, hidden), hidden),       b3=u(ks[5], (1, 1), hidden),
    )


def predict_reference(x, p):
    h1 = jnp.maximum(x * p["w1"] + p["b1"], 0.0)
    h2 = jax.nn.sigmoid(
        jnp.dot(h1, p["w2"], precision=jax.lax.Precision.HIGHEST) + p["b2"])
    return jnp.sum(h2 * p["w3"], axis=-1, keepdims=True) + p["b3"]


def mc_reference(x, p, mask1, mask2, sampling):
    n, h = x.shape[0], p["w1"].shape[1]
    m1 = mask1.reshape(sampling, n, h)
    m2 = mask2.reshape(sampling, n, h)
    h1 = jnp.maximum(x * p["w1"] + p["b1"], 0.0)          # (N, H), same for every sample
    h1 = h1[None] * m1                                     # (S, N, H)
    h2 = jax.nn.sigmoid(
        jnp.einsum("snh,hk->snk", h1, p["w2"],
                   precision=jax.lax.Precision.HIGHEST) + p["b2"])
    h2 = h2 * m2
    return jnp.sum(h2 * p["w3"], axis=-1, keepdims=True) + p["b3"]   # (S, N, 1)


# ----------------------------------------------------------------------------
if __name__ == "__main__":
    N, HIDDEN, SAMPLING, DROP_P = 8, 32, 8, 0.1

    key = jax.random.PRNGKey(0)
    kx, kp, kd = jax.random.split(key, 3)
    x = jax.random.normal(kx, (N, 1), jnp.float32)
    params = make_params(kp, HIDDEN)

    # ---- predict() path (mc_flg=False): dropout inactive -------------------
    y = mc_dropout_predict(x, params)
    jax.block_until_ready(y)
    y_ref = predict_reference(x, params)
    assert y.shape == (N, 1)
    assert jnp.allclose(y, y_ref, atol=1e-3, rtol=1e-3), "predict path mismatch"

    # ---- mc() path (mc_flg=True): (mean, var, result) ----------------------
    mean, var, result = mc_dropout_mc_forward(
        x, params, kd, drop_p=DROP_P, sampling=SAMPLING)
    jax.block_until_ready((mean, var, result))

    assert result.shape == (SAMPLING, N, 1)
    assert mean.shape == (N, 1) and var.shape == (N, 1)

    # Kernel statistics must match statistics of the returned samples.
    mean_chk = jnp.mean(result, axis=0)
    var_chk = jnp.mean(result ** 2, axis=0) - mean_chk ** 2
    assert jnp.allclose(mean, mean_chk, atol=1e-5), "mean mismatch"
    assert jnp.allclose(var, var_chk, atol=1e-5), "var mismatch"

    # Samples must match a pure-JAX forward using the same dropout masks.
    mask1, mask2 = make_dropout_masks(kd, N, HIDDEN, SAMPLING, DROP_P)
    result_ref = mc_reference(x, params, mask1, mask2, SAMPLING)
    assert jnp.allclose(result, result_ref, atol=1e-3, rtol=1e-3), "mc samples mismatch"

    print("KERNEL_OK")
</pallas_src>

<mosaic_0001>
module attributes {stable_mosaic.version = 11 : i64} {
  func.func @predict_kernel(%arg0: i32, %arg1: memref<8x1xf32, #tpu.memory_space<vmem>>, %arg2: memref<1x32xf32, #tpu.memory_space<vmem>>, %arg3: memref<1x32xf32, #tpu.memory_space<vmem>>, %arg4: memref<32x32xf32, #tpu.memory_space<vmem>>, %arg5: memref<1x32xf32, #tpu.memory_space<vmem>>, %arg6: memref<1x32xf32, #tpu.memory_space<vmem>>, %arg7: memref<1x1xf32, #tpu.memory_space<vmem>>, %arg8: memref<8x1xf32, #tpu.memory_space<vmem>>) attributes {dimension_semantics = [#tpu.dimension_semantics<arbitrary>], iteration_bounds = array<i64: 1>, scalar_prefetch = 0 : i64, scratch_operands = 0 : i64, tpu.core_type = #tpu.core_type<tc>, window_params = [{pipeline_mode = #tpu.pipeline_mode<synchronous>, transform_indices = @transform_0, window_bounds = array<i64: 8, 1>}, {pipeline_mode = #tpu.pipeline_mode<synchronous>, transform_indices = @transform_1, window_bounds = array<i64: 1, 32>}, {pipeline_mode = #tpu.pipeline_mode<synchronous>, transform_indices = @transform_2, window_bounds = array<i64: 1, 32>}, {pipeline_mode = #tpu.pipeline_mode<synchronous>, transform_indices = @transform_3, window_bounds = array<i64: 32, 32>}, {pipeline_mode = #tpu.pipeline_mode<synchronous>, transform_indices = @transform_4, window_bounds = array<i64: 1, 32>}, {pipeline_mode = #tpu.pipeline_mode<synchronous>, transform_indices = @transform_5, window_bounds = array<i64: 1, 32>}, {pipeline_mode = #tpu.pipeline_mode<synchronous>, transform_indices = @transform_6, window_bounds = array<i64: 1, 1>}, {pipeline_mode = #tpu.pipeline_mode<synchronous>, transform_indices = @transform_7, window_bounds = array<i64: 8, 1>}]} {
    %c0 = arith.constant 0 : index
    %c0_0 = arith.constant 0 : index
    %0 = vector.load %arg1[%c0, %c0_0] : memref<8x1xf32, #tpu.memory_space<vmem>>, vector<8x1xf32>
    %c0_1 = arith.constant 0 : index
    %c0_2 = arith.constant 0 : index
    %1 = vector.load %arg2[%c0_1, %c0_2] : memref<1x32xf32, #tpu.memory_space<vmem>>, vector<1x32xf32>
    %2 = vector.broadcast %0 : vector<8x1xf32> to vector<8x32xf32>
    %3 = vector.broadcast %1 : vector<1x32xf32> to vector<8x32xf32>
    %4 = arith.mulf %2, %3 : vector<8x32xf32>
    %c0_3 = arith.constant 0 : index
    %c0_4 = arith.constant 0 : index
    %5 = vector.load %arg3[%c0_3, %c0_4] : memref<1x32xf32, #tpu.memory_space<vmem>>, vector<1x32xf32>
    %6 = vector.broadcast %5 : vector<1x32xf32> to vector<8x32xf32>
    %7 = arith.addf %4, %6 : vector<8x32xf32>
    %cst = arith.constant 0.000000e+00 : f32
    %8 = vector.broadcast %cst : f32 to vector<8x32xf32>
    %9 = arith.maximumf %7, %8 : vector<8x32xf32>
    %c0_5 = arith.constant 0 : index
    %c0_6 = arith.constant 0 : index
    %10 = vector.load %arg4[%c0_5, %c0_6] : memref<32x32xf32, #tpu.memory_space<vmem>>, vector<32x32xf32>
    %cst_7 = arith.constant dense<0.000000e+00> : vector<8x32xf32>
    %11 = tpu.matmul %9, %10, %cst_7 {dimension_numbers = #tpu.dot_dimension_numbers<[1], [0], [0], [1], [0, 0, 1, 1], [], []>} : vector<8x32xf32>, vector<32x32xf32>, vector<8x32xf32> -> vector<8x32xf32>
    %c0_8 = arith.constant 0 : index
    %c0_9 = arith.constant 0 : index
    %12 = vector.load %arg5[%c0_8, %c0_9] : memref<1x32xf32, #tpu.memory_space<vmem>>, vector<1x32xf32>
    %13 = vector.broadcast %12 : vector<1x32xf32> to vector<8x32xf32>
    %14 = arith.addf %11, %13 : vector<8x32xf32>
    %15 = arith.negf %14 : vector<8x32xf32>
    %16 = math.exp %15 : vector<8x32xf32>
    %cst_10 = arith.constant 1.000000e+00 : f32
    %17 = vector.broadcast %cst_10 : f32 to vector<8x32xf32>
    %18 = arith.addf %17, %16 : vector<8x32xf32>
    %19 = arith.divf %17, %18 : vector<8x32xf32>
    %c0_11 = arith.constant 0 : index
    %c0_12 = arith.constant 0 : index
    %20 = vector.load %arg6[%c0_11, %c0_12] : memref<1x32xf32, #tpu.memory_space<vmem>>, vector<1x32xf32>
    %21 = vector.broadcast %20 : vector<1x32xf32> to vector<8x32xf32>
    %22 = arith.mulf %19, %21 : vector<8x32xf32>
    %cst_13 = arith.constant dense<0.000000e+00> : vector<8xf32>
    %23 = vector.multi_reduction <add>, %22, %cst_13 [1] : vector<8x32xf32> to vector<8xf32>
    %24 = vector.shape_cast %23 : vector<8xf32> to vector<8x1xf32>
    %c0_14 = arith.constant 0 : index
    %c0_15 = arith.constant 0 : index
    %25 = vector.load %arg7[%c0_14, %c0_15] : memref<1x1xf32, #tpu.memory_space<vmem>>, vector<1x1xf32>
    %26 = vector.broadcast %25 : vector<1x1xf32> to vector<8x1xf32>
    %27 = arith.addf %24, %26 : vector<8x1xf32>
    %c0_16 = arith.constant 0 : index
    %c0_17 = arith.constant 0 : index
    %28 = vector.load %arg8[%c0_16, %c0_17] : memref<8x1xf32, #tpu.memory_space<vmem>>, vector<8x1xf32>
    tpu.vector_store %arg8[%c0_16, %c0_17], %27 {strides = array<i32>} : memref<8x1xf32, #tpu.memory_space<vmem>>, vector<8x1xf32>,
    return
  }
  func.func @transform_0(%arg0: i32) -> (i32, i32) {
    %c0_i32 = arith.constant 0 : i32
    %c0_i32_0 = arith.constant 0 : i32
    %c0_i32_1 = arith.constant 0 : i32
    return %c0_i32, %c0_i32_0 : i32, i32
  }
  func.func @transform_1(%arg0: i32) -> (i32, i32) {
    %c0_i32 = arith.constant 0 : i32
    %c0_i32_0 = arith.constant 0 : i32
    %c0_i32_1 = arith.constant 0 : i32
    return %c0_i32, %c0_i32_0 : i32, i32
  }
  func.func @transform_2(%arg0: i32) -> (i32, i32) {
    %c0_i32 = arith.constant 0 : i32
    %c0_i32_0 = arith.constant 0 : i32
    %c0_i32_1 = arith.constant 0 : i32
    return %c0_i32, %c0_i32_0 : i32, i32
  }
  func.func @transform_3(%arg0: i32) -> (i32, i32) {
    %c0_i32 = arith.constant 0 : i32
    %c0_i32_0 = arith.constant 0 : i32
    %c0_i32_1 = arith.constant 0 : i32
    return %c0_i32, %c0_i32_0 : i32, i32
  }
  func.func @transform_4(%arg0: i32) -> (i32, i32) {
    %c0_i32 = arith.constant 0 : i32
    %c0_i32_0 = arith.constant 0 : i32
    %c0_i32_1 = arith.constant 0 : i32
    return %c0_i32, %c0_i32_0 : i32, i32
  }
  func.func @transform_5(%arg0: i32) -> (i32, i32) {
    %c0_i32 = arith.constant 0 : i32
    %c0_i32_0 = arith.constant 0 : i32
    %c0_i32_1 = arith.constant 0 : i32
    return %c0_i32, %c0_i32_0 : i32, i32
  }
  func.func @transform_6(%arg0: i32) -> (i32, i32) {
    %c0_i32 = arith.constant 0 : i32
    %c0_i32_0 = arith.constant 0 : i32
    %c0_i32_1 = arith.constant 0 : i32
    return %c0_i32, %c0_i32_0 : i32, i32
  }
  func.func @transform_7(%arg0: i32) -> (i32, i32) {
    %c0_i32 = arith.constant 0 : i32
    %c0_i32_0 = arith.constant 0 : i32
    %c0_i32_1 = arith.constant 0 : i32
    return %c0_i32, %c0_i32_0 : i32, i32
  }
}

</mosaic_0001>

<llo_original>
// kernel: tpu_custom_call.1
$region0: #{tpu_custom_call.1}
  #allocation0 [shape = 'u32[]', space=smem, size = 0x4, offset = 0x4, fixed_abs, tag = 'smem constant byte address 0x4 - core index']
  #allocation1 [shape = 'u32[144,128]{1,0:T(1,128)}', space=vmem, size = 0x12000, scoped, tag = 'internal scratch']
  #allocation2 [shape = 'f32[1,1]{1,0:T(1,128)S(1)}', space=vmem, size = 0x200, scoped, tag = 'scoped memory for tpu_custom_call.1']
  %s0 = inlined_call_operand.vmem [shape: f32[8,1], index: 0, kind: input, shape index: {}]
  %s1 = inlined_call_operand.vmem [shape: f32[1,32], index: 1, kind: input, shape index: {}]
  %s2 = inlined_call_operand.vmem [shape: f32[1,32], index: 2, kind: input, shape index: {}]
  %s3 = inlined_call_operand.hbm [shape: f32[32,32], index: 3, kind: input, shape index: {}]
  %s4 = inlined_call_operand.vmem [shape: f32[1,32], index: 4, kind: input, shape index: {}]
  %s5 = inlined_call_operand.vmem [shape: f32[1,32], index: 5, kind: input, shape index: {}]
  %s6 = inlined_call_operand.<no memory space> [shape: f32[1,1], index: 6, kind: input, shape index: {}]
  %s7 = inlined_call_operand.vmem [shape: f32[8,1], index: 7, kind: output, shape index: {}]
  %s8 = sld [smem:[#allocation0]]
  $region42: #{tpu_custom_call.1} parent=0
    _
  %s10 = ssub.s32 1, %s8
  %s11 = scalar_select 0, %s10, %s8
  %v12 = vstv %s6
  %13 = vst [vmem:[#allocation2] sm:$0x1] %v12
  $region1: #{tpu_custom_call.1} parent=0
    #allocation3 [shape = 'u8[16384]{0}', space=vmem, size = 0x4000, scoped, tag = 'input window, operand 3, single buffered']
    #allocation4 [shape = 's32[1]{0}', space=sflag, size = 0x4, scoped, tag = 'scoped memory for tpu_custom_call.1']
    %14 = vsyncpa [#allocation4], 0
    // Predicated region
    $region2: #{tpu_custom_call.1} parent=1 // pred_check
      _
    $region3: #{tpu_custom_call.1} parent=1 // pred_check_branch
      %16 = sbr.rel (0) target = $region5
    $region4: #{tpu_custom_call.1} parent=1 // pred_region
      _
    $region5: #{tpu_custom_call.1} parent=1 // pred_fallthru
      _
    // Predicated region
    $region6: #{tpu_custom_call.1} parent=1 // pred_check
      _
    $region7: #{tpu_custom_call.1} parent=1 // pred_check_branch
      %18 = sbr.rel (0) target = $region9
    $region8: #{tpu_custom_call.1} parent=1 // pred_region
      _
    $region9: #{tpu_custom_call.1} parent=1 // pred_fallthru
      _
    // Predicated region
    $region10: #{tpu_custom_call.1} parent=1 // pred_check
      _
    $region11: #{tpu_custom_call.1} parent=1 // pred_check_branch
      %20 = sbr.rel (0) target = $region13
    $region12: #{tpu_custom_call.1} parent=1 // pred_region
      _
    $region13: #{tpu_custom_call.1} parent=1 // pred_fallthru
      _
    // Predicated region
    $region14: #{tpu_custom_call.1} parent=1 // pred_check
      _
    $region15: #{tpu_custom_call.1} parent=1 // pred_check_branch
      %22 = sbr.rel (0) target = $region17
    $region16: #{tpu_custom_call.1} parent=1 // pred_region
      %s24 = ssub.s32 512, 512
      %25 = vsyncadd [#allocation4], %s24
      %s26 = sshll.u32 [#allocation3], 4
      %s27 = int_to_ptr.vmem [resolvable:$true] %s26
      %32 = dma.hbm_to_vmem [thread:$0]  %s3, 512, %s27, [#allocation4], 128, 128, 8
    $region17: #{tpu_custom_call.1} parent=1 // pred_fallthru
      _
    // Predicated region
    $region18: #{tpu_custom_call.1} parent=1 // pred_check
      _
    $region19: #{tpu_custom_call.1} parent=1 // pred_check_branch
      %34 = sbr.rel (0) target = $region21
    $region20: #{tpu_custom_call.1} parent=1 // pred_region
      _
    $region21: #{tpu_custom_call.1} parent=1 // pred_fallthru
      _
    // Predicated region
    $region22: #{tpu_custom_call.1} parent=1 // pred_check
      _
    $region23: #{tpu_custom_call.1} parent=1 // pred_check_branch
      %36 = sbr.rel (0) target = $region25
    $region24: #{tpu_custom_call.1} parent=1 // pred_region
      _
    $region25: #{tpu_custom_call.1} parent=1 // pred_fallthru
      _
    // Predicated region
    $region26: #{tpu_custom_call.1} parent=1 // pred_check
      _
    $region27: #{tpu_custom_call.1} parent=1 // pred_check_branch
      %38 = sbr.rel (0) target = $region29
    $region28: #{tpu_custom_call.1} parent=1 // pred_region
      _
    $region29: #{tpu_custom_call.1} parent=1 // pred_fallthru
      _
    // Predicated region
    $region30: #{tpu_custom_call.1} parent=1 // pred_check
      _
    $region31: #{tpu_custom_call.1} parent=1 // pred_check_branch
      %40 = sbr.rel (0) target = $region33
    $region32: #{tpu_custom_call.1} parent=1 // pred_region
      %41 = dma.done [#allocation4], 512
    $region33: #{tpu_custom_call.1} parent=1 // pred_fallthru
      _
    %v42 = vld [vmem:[%s0] sm:$0xff]
    %v43 = vld [vmem:[%s1] sm:$0x1]
    %45 = vset.pattern.permute.xlu0 0
    %46 = vperm.xlu0 %45, %v42
    %v47 = vpop.permute.xlu0 %46
    %v50 = vlaneseq
    %v51 = vshrl.u32 %v50, 7
    %v52 = vsub.s32 0, %v51
    %v53 = vrot.slane %v43, %v52
    %v55 = vmul.f32 %v47, %v53
    %v56 = vld [vmem:[%s2] sm:$0x1]
    %v58 = vlaneseq
    %v59 = vshrl.u32 %v58, 7
    %v60 = vsub.s32 0, %v59
    %v61 = vrot.slane %v56, %v60
    %v63 = vadd.f32 %v55, %v61
    %v64 = vmax.f32 %v63, 0.0
    %v65 = vld [vmem:[#allocation3] sm:$0xff]
    %v66 = vld [vmem:[#allocation3 + $0x8] sm:$0xff]
    %v67 = vld [vmem:[#allocation3 + $0x10] sm:$0xff]
    %v68 = vld [vmem:[#allocation3 + $0x18] sm:$0xff]
    %v69 = vld [vmem:[%s4] sm:$0x1]
    %v71 = vlaneseq
    %v72 = vshrl.u32 %v71, 7
    %v73 = vsub.s32 0, %v72
    %v74 = vrot.slane %v69, %v73
    %vm76 = vcmask 261120
    %v78 = vsel %vm76, %v64, 0
    %80 = vmatprep.subr.mxu0 0.0
    %81 = vmatpush1.msra.mxu0 %v65
    %82 = vmatprep.subr.mxu0 0.0
    %83 = vmatpush1.msra.mxu0 %v66
    %84 = vmatprep.subr.mxu0 0.0
    %85 = vmatpush1.msra.mxu0 %v67
    %86 = vmatprep.subr.mxu0 0.0
    %87 = vmatpush1.msra.mxu0 %v68
    %88 = vmatprep.subr.mxu0 0.0
    %89 = vmatpush1.msra.mxu0 0.0
    %90 = vmatprep.subr.mxu0 0.0
    %91 = vmatpush1.msra.mxu0 0.0
    %92 = vmatprep.subr.mxu0 0.0
    %93 = vmatpush1.msra.mxu0 0.0
    %94 = vmatprep.subr.mxu0 0.0
    %95 = vmatpush1.msra.mxu0 0.0
    %96 = vmatprep.subr.mxu0 0.0
    %97 = vmatpush1.msra.mxu0 0.0
    %98 = vmatprep.subr.mxu0 0.0
    %99 = vmatpush1.msra.mxu0 0.0
    %100 = vmatprep.subr.mxu0 0.0
    %101 = vmatpush1.msra.mxu0 0.0
    %102 = vmatprep.subr.mxu0 0.0
    %103 = vmatpush1.msra.mxu0 0.0
    %104 = vmatprep.subr.mxu0 0.0
    %105 = vmatpush1.msra.mxu0 0.0
    %106 = vmatprep.subr.mxu0 0.0
    %107 = vmatpush1.msra.mxu0 0.0
    %108 = vmatprep.subr.mxu0 0.0
    %109 = vmatpush1.msra.mxu0 0.0
    %110 = vmatprep.subr.mxu0 0.0
    %111 = vmatpush1.msra.mxu0 0.0
    %112 = vmatprep.subr.mxu0 0.0
    %113 = vmatpush1.msra.mxu0 0.0
    %114 = vmatprep.subr.mxu0 0.0
    %115 = vmatpush1.msra.mxu0 0.0
    %116 = vmatprep.subr.mxu0 0.0
    %117 = vmatpush1.msra.mxu0 0.0
    %118 = vmatprep.subr.mxu0 0.0
    %119 = vmatpush1.msra.mxu0 0.0
    %120 = vmatprep.subr.mxu0 0.0
    %121 = vmatpush1.msra.mxu0 0.0
    %122 = vmatprep.subr.mxu0 0.0
    %123 = vmatpush1.msra.mxu0 0.0
    %124 = vmatprep.subr.mxu0 0.0
    %125 = vmatpush1.msra.mxu0 0.0
    %126 = vmatprep.subr.mxu0 0.0
    %127 = vmatpush1.msra.mxu0 0.0
    %128 = vmatprep.subr.mxu0 0.0
    %129 = vmatpush1.msra.mxu0 0.0
    %130 = vmatprep.subr.mxu0 0.0
    %131 = vmatpush1.msra.mxu0 0.0
    %132 = vmatprep.subr.mxu0 0.0
    %133 = vmatpush1.msra.mxu0 0.0
    %134 = vmatprep.subr.mxu0 0.0
    %135 = vmatpush1.msra.mxu0 0.0
    %136 = vmatprep.subr.mxu0 0.0
    %137 = vmatpush1.msra.mxu0 0.0
    %138 = vmatprep.subr.mxu0 0.0
    %139 = vmatpush1.msra.mxu0 0.0
    %140 = vmatprep.subr.mxu0 0.0
    %141 = vmatpush1.msra.mxu0 0.0
    %142 = vmatprep.subr.mxu0 0.0
    %143 = vmatpush1.msra.mxu0 0.0
    %144 = vmatprep.mubr.f32.mxu0 0.0
    %145 = vmatmul.mubr.f32.gmra.mrb[0].mxu0 %v78
    %v146 = vpop.f32.mrb[0].mxu0
    %v147 = vadd.f32 %v74, %v146
    %v148 = vpop.f32.mrb[0].mxu0
    %149 = vdwg.mxu0
    %v150 = vxor.u32 %v147, 2147483648
    %v151 = vmul.f32 %v150, 1.442695
    %v152 = vpow.pop %v151
    %v153 = vadd.f32 %v152, 1.0
    %v154 = vrcp.pop %v153
    %v155 = vmul.f32 1.0, %v154
    %v156 = vld [vmem:[%s5] sm:$0x1]
    %v158 = vlaneseq
    %v159 = vshrl.u32 %v158, 7
    %v160 = vsub.s32 0, %v159
    %v161 = vrot.slane %v156, %v160
    %v163 = vmul.f32 %v155, %v161
    %v164 = vsel %vm76, %v163, 0.0
    %165 = vadd.xlane.f32.xlu0 %v164
    %v166 = vpop.xlane.xlu0 %165
    %v167 = vld [vmem:[#allocation2] sm:$0x1]
    %v169 = vlaneseq
    %v170 = vshrl.u32 %v169, 7
    %v171 = vsub.s32 0, %v170
    %v172 = vrot.slane %v167, %v171
    %v174 = vadd.f32 %v166, %v172
    %vm175 = vcmask 7168
    %176 = vst.msk [vmem:[%s7] sm:$0xff] %vm175, %v174
    // Predicated region
    $region34: #{tpu_custom_call.1} parent=1 // pred_check
      _
    $region35: #{tpu_custom_call.1} parent=1 // pred_check_branch
      %178 = sbr.rel (0) target = $region37
    $region36: #{tpu_custom_call.1} parent=1 // pred_region
      _
    $region37: #{tpu_custom_call.1} parent=1 // pred_fallthru
      _
    // Predicated region
    $region38: #{tpu_custom_call.1} parent=1 // pred_check
      _
    $region39: #{tpu_custom_call.1} parent=1 // pred_check_branch
      %180 = sbr.rel (0) target = $region41
    $region40: #{tpu_custom_call.1} parent=1 // pred_region
      _
    $region41: #{tpu_custom_call.1} parent=1 // pred_fallthru
      _
    %181 = vsyncpa [#allocation4], 1

</llo_original>
